<compile_context>
chip_gen: v7x
topology: tpu7x:2x2x1
jax: 0.10.0
libtpu: 0.0.40
codegen_flags: <defaults>
</compile_context>

<pallas_src>
import math
from functools import partial

import jax
import jax.numpy as jnp
from jax.experimental import pallas as pl
from jax.experimental.pallas import tpu as pltpu


def _round_up(x: int, n: int) -> int:
    return ((x + n - 1) // n) * n


def _vmem_capacity_bytes() -> int:
    """Physical per-core VMEM; conservative fallback if the query is unavailable."""
    try:
        return int(pltpu.get_tpu_info().vmem_capacity_bytes)
    except Exception:
        return 64 << 20  # v7x-sized (smallest current generation) -> safe everywhere


def _add_margin_kernel(x_ref, w_ref, labels_ref, out_ref, *, s, sm):
    """One (tm, tn) output tile.

    x_ref:      (tm, D)   pre-normalized input rows     (compute dtype)
    w_ref:      (tn, D)   pre-normalized weight rows    (compute dtype)
    labels_ref: (tm, 1)   int32 class label per row (-1 for padded rows)
    out_ref:    (tm, tn)  s*cos(theta), with s*m subtracted on the label column
    """
    # MXU matmul contracting the feature dim of both operands directly (no
    # transpose); accumulate in f32 regardless of the streaming dtype.
    cosine = jax.lax.dot_general(
        x_ref[...], w_ref[...],
        dimension_numbers=(((1,), (1,)), ((), ())),
        preferred_element_type=jnp.float32)                  # (tm, tn) f32

    tm, tn = cosine.shape
    # Shift labels into this class tile's local coordinates ((tm,1) op) and compare
    # against a plain local iota -> saves the (tm,tn) add of j*tn.
    labels_local = labels_ref[...] - pl.program_id(1) * tn    # (tm, 1) int32
    col = jax.lax.broadcasted_iota(jnp.int32, (tm, tn), 1)

    cos_s = cosine * s
    out_ref[...] = jnp.where(col == labels_local, cos_s - sm, cos_s).astype(out_ref.dtype)


def add_margin_product(x, weight, labels, *, s=30.0, m=0.4,
                       compute_dtype=jnp.bfloat16, out_dtype=jnp.float32,
                       block_b=None, block_c=512):
    """CosFace head forward.

    x: (B, D) float, weight: (C, D) float, labels: (B,) int -> (B, C) out_dtype.

    compute_dtype: streaming/matmul input dtype (bf16 default; accumulation is
                   always f32). Pass jnp.float32 for bit-accurate validation.
    block_b/block_c: optional caps on the batch/class tile sizes (auto if None).
    """
    B, D = x.shape
    C, D2 = weight.shape
    assert D == D2
    assert labels.shape == (B,)

    in_bytes = jnp.dtype(compute_dtype).itemsize
    out_bytes = jnp.dtype(out_dtype).itemsize
    sub = 8 if in_bytes >= 4 else 16          # sublane multiple for streamed dtype

    # ---- Hoisted normalization (F.normalize: denom = max(||v||, 1e-12)) ---------
    x32 = x.astype(jnp.float32)
    w32 = weight.astype(jnp.float32)
    eps2 = 1e-24                               # (1e-12)^2, representable in f32
    xn = x32 * jax.lax.rsqrt(jnp.maximum(jnp.sum(x32 * x32, -1, keepdims=True), eps2))
    wn = w32 * jax.lax.rsqrt(jnp.maximum(jnp.sum(w32 * w32, -1, keepdims=True), eps2))
    xn = xn.astype(compute_dtype)
    wn = wn.astype(compute_dtype)
    labels2d = labels.reshape(B, 1).astype(jnp.int32)

    # ---- Tile plan ---------------------------------------------------------------
    vmem_cap = _vmem_capacity_bytes()
    budget = (vmem_cap * 7) // 10              # leave headroom for the compiler

    # Batch tile: make the whole (padded) batch resident when it fits so the weight
    # matrix only streams from HBM once; otherwise the largest 256-multiple the
    # x-tile budget allows (keeps the 256-wide v6e/v7x MXU filled).
    x_budget = min(8 << 20, budget // 3)
    tm_auto = max(256, (x_budget // max(D * in_bytes, 1)) // 256 * 256)
    tm_cap = tm_auto if block_b is None else max(sub, _round_up(block_b, sub))
    tm = min(_round_up(B, sub), tm_cap)

    tn_cap = max(128, _round_up(block_c, 128))
    tn = min(_round_up(C, 128), tn_cap)

    def tiles_bytes(tm_, tn_):
        # double-buffered x/W/labels inputs + output tile
        return 2 * (tm_ * D * in_bytes + tn_ * D * in_bytes
                    + tm_ * tn_ * out_bytes + tm_ * 4)

    # Shrink tn first (extra class tiles are cheap), then tm, until the plan fits.
    while tiles_bytes(tm, tn) > budget and tn > 128:
        tn = max(128, ((tn // 2) // 128) * 128)
    while tiles_bytes(tm, tn) > budget and tm > sub:
        tm = max(sub, ((tm // 2) // sub) * sub)
    # TODO(synk): for very large D on v7x a K (feature) grid axis with an f32
    # accumulator scratch would keep tn >= 512; not needed for typical embeddings.

    Bp, Cp = _round_up(B, tm), _round_up(C, tn)

    # ---- Padding (padded rows/cols are zero and sliced off; labels pad = -1) ----
    if Bp != B:
        xn = jnp.pad(xn, ((0, Bp - B), (0, 0)))
        labels2d = jnp.pad(labels2d, ((0, Bp - B), (0, 0)), constant_values=-1)
    if Cp != C:
        wn = jnp.pad(wn, ((0, Cp - C), (0, 0)))

    grid = (Bp // tm, Cp // tn)
    n_batch_tiles = grid[0]

    # ---- VMEM limit: always set, generation-aware cap ----------------------------
    vmem_need = tiles_bytes(tm, tn) + (2 << 20)
    vmem_limit = min(max(vmem_need, 32 << 20), max(vmem_cap - (8 << 20), 32 << 20))

    cost = pl.CostEstimate(
        flops=2 * Bp * Cp * D,
        transcendentals=0,
        # x is resident across the inner class axis -> read once per batch tile;
        # W is re-read once per batch tile (ideally n_batch_tiles == 1).
        bytes_accessed=(Bp * D * in_bytes
                        + n_batch_tiles * Cp * D * in_bytes
                        + Bp * 4
                        + Bp * Cp * out_bytes))

    kernel = partial(_add_margin_kernel, s=float(s), sm=float(s) * float(m))

    out = pl.pallas_call(
        kernel,
        out_shape=jax.ShapeDtypeStruct((Bp, Cp), out_dtype),
        grid_spec=pltpu.PrefetchScalarGridSpec(
            num_scalar_prefetch=0,
            grid=grid,
            in_specs=[
                pl.BlockSpec((tm, D), lambda i, j: (i, 0)),   # normalized x tile
                pl.BlockSpec((tn, D), lambda i, j: (j, 0)),   # normalized W tile
                pl.BlockSpec((tm, 1), lambda i, j: (i, 0)),   # labels column
            ],
            out_specs=pl.BlockSpec((tm, tn), lambda i, j: (i, j)),
        ),
        compiler_params=pltpu.CompilerParams(
            dimension_semantics=("parallel", "parallel"),
            vmem_limit_bytes=int(vmem_limit)),
        cost_estimate=cost,
    )(xn, wn, labels2d)

    return out[:B, :C]


def reference(x, weight, labels, *, s=30.0, m=0.4):
    xn = x / jnp.maximum(jnp.linalg.norm(x, axis=-1, keepdims=True), 1e-12)
    wn = weight / jnp.maximum(jnp.linalg.norm(weight, axis=-1, keepdims=True), 1e-12)
    cosine = xn @ wn.T
    one_hot = jax.nn.one_hot(labels, weight.shape[0], dtype=jnp.float32)
    return s * (one_hot * (cosine - m) + (1.0 - one_hot) * cosine)


if __name__ == "__main__":
    # Small shapes that still exercise multi-tile grids plus ragged padding.
    B, in_features, out_features = 10, 32, 200
    s_val, m_val = 30.0, 0.4

    key = jax.random.PRNGKey(0)
    kx, kw, kl = jax.random.split(key, 3)

    x = jax.random.normal(kx, (B, in_features), dtype=jnp.float32)
    # Xavier-uniform init for weight (out_features, in_features), deterministic.
    bound = math.sqrt(6.0 / (in_features + out_features))
    weight = jax.random.uniform(kw, (out_features, in_features),
                                minval=-bound, maxval=bound, dtype=jnp.float32)
    labels = jax.random.randint(kl, (B,), 0, out_features, dtype=jnp.int32)

    ref = reference(x, weight, labels, s=s_val, m=m_val)

    # 1) f32 validation path, small tiles to force a 2x2 grid + ragged padding.
    out_f32 = add_margin_product(x, weight, labels, s=s_val, m=m_val,
                                 compute_dtype=jnp.float32,
                                 block_b=8, block_c=128)
    out_f32 = jax.block_until_ready(out_f32)
    assert out_f32.shape == (B, out_features)
    assert jnp.allclose(out_f32, ref, atol=1e-4, rtol=1e-4), "f32 path mismatch"

    # 2) default optimized path: bf16 streaming, f32 accumulation, batch resident.
    #    bf16 inputs bound the cosine error by ~2*2^-8 -> |error| <= ~0.24 after *s.
    out_bf16 = add_margin_product(x, weight, labels, s=s_val, m=m_val,
                                  block_c=128)
    out_bf16 = jax.block_until_ready(out_bf16)
    assert out_bf16.shape == (B, out_features)
    assert float(jnp.max(jnp.abs(out_bf16 - ref))) < 0.25, "bf16 path mismatch"

    print("KERNEL_OK")
</pallas_src>

<mosaic_0001>
module attributes {stable_mosaic.version = 11 : i64} {
  func.func @_add_margin_kernel(%arg0: i32, %arg1: i32, %arg2: memref<8x32xf32, #tpu.memory_space<vmem>>, %arg3: memref<128x32xf32, #tpu.memory_space<vmem>>, %arg4: memref<8x1xi32, #tpu.memory_space<vmem>>, %arg5: memref<8x128xf32, #tpu.memory_space<vmem>>) attributes {dimension_semantics = [#tpu.dimension_semantics<parallel>, #tpu.dimension_semantics<parallel>], iteration_bounds = array<i64: 2, 2>, scalar_prefetch = 0 : i64, scratch_operands = 0 : i64, tpu.core_type = #tpu.core_type<tc>, window_params = [{transform_indices = @transform_0, window_bounds = array<i64: 8, 32>}, {transform_indices = @transform_1, window_bounds = array<i64: 128, 32>}, {transform_indices = @transform_2, window_bounds = array<i64: 8, 1>}, {transform_indices = @transform_3, window_bounds = array<i64: 8, 128>}]} {
    %c0 = arith.constant 0 : index
    %c0_0 = arith.constant 0 : index
    %0 = vector.load %arg2[%c0, %c0_0] : memref<8x32xf32, #tpu.memory_space<vmem>>, vector<8x32xf32>
    %c0_1 = arith.constant 0 : index
    %c0_2 = arith.constant 0 : index
    %1 = vector.load %arg3[%c0_1, %c0_2] : memref<128x32xf32, #tpu.memory_space<vmem>>, vector<128x32xf32>
    %cst = arith.constant dense<0.000000e+00> : vector<8x128xf32>
    %2 = tpu.matmul %0, %1, %cst {dimension_numbers = #tpu.dot_dimension_numbers<[1], [1], [0], [0], [0, 0, 1, 0], [], []>} : vector<8x32xf32>, vector<128x32xf32>, vector<8x128xf32> -> vector<8x128xf32>
    %c0_3 = arith.constant 0 : index
    %c0_4 = arith.constant 0 : index
    %3 = vector.load %arg4[%c0_3, %c0_4] : memref<8x1xi32, #tpu.memory_space<vmem>>, vector<8x1xi32>
    %c128_i32 = arith.constant 128 : i32
    %4 = arith.muli %arg1, %c128_i32 : i32
    %5 = vector.broadcast %4 : i32 to vector<8x1xi32>
    %6 = arith.subi %3, %5 : vector<8x1xi32>
    %7 = tpu.iota {dimensions = array<i32: 1>} : vector<8x128xi32>
    %cst_5 = arith.constant 3.000000e+01 : f32
    %8 = vector.broadcast %cst_5 : f32 to vector<8x128xf32>
    %9 = arith.mulf %2, %8 : vector<8x128xf32>
    %10 = vector.broadcast %6 : vector<8x1xi32> to vector<8x128xi32>
    %11 = arith.cmpi eq, %7, %10 : vector<8x128xi32>
    %cst_6 = arith.constant 1.200000e+01 : f32
    %12 = vector.broadcast %cst_6 : f32 to vector<8x128xf32>
    %13 = arith.subf %9, %12 : vector<8x128xf32>
    %14 = arith.select %11, %13, %9 : vector<8x128xi1>, vector<8x128xf32>
    %c0_7 = arith.constant 0 : index
    %c0_8 = arith.constant 0 : index
    %15 = vector.load %arg5[%c0_7, %c0_8] : memref<8x128xf32, #tpu.memory_space<vmem>>, vector<8x128xf32>
    tpu.vector_store %arg5[%c0_7, %c0_8], %14 {strides = array<i32>} : memref<8x128xf32, #tpu.memory_space<vmem>>, vector<8x128xf32>,
    return
  }
  func.func @transform_0(%arg0: i32, %arg1: i32) -> (i32, i32) {
    %c0_i32 = arith.constant 0 : i32
    %c0_i32_0 = arith.constant 0 : i32
    return %arg0, %c0_i32 : i32, i32
  }
  func.func @transform_1(%arg0: i32, %arg1: i32) -> (i32, i32) {
    %c0_i32 = arith.constant 0 : i32
    %c0_i32_0 = arith.constant 0 : i32
    return %arg1, %c0_i32 : i32, i32
  }
  func.func @transform_2(%arg0: i32, %arg1: i32) -> (i32, i32) {
    %c0_i32 = arith.constant 0 : i32
    %c0_i32_0 = arith.constant 0 : i32
    return %arg0, %c0_i32 : i32, i32
  }
  func.func @transform_3(%arg0: i32, %arg1: i32) -> (i32, i32) {
    %c0_i32 = arith.constant 0 : i32
    return %arg0, %arg1 : i32, i32
  }
}

</mosaic_0001>

<llo_original>
// kernel: tpu_custom_call.1
$region0: #{tpu_custom_call.1}
  #allocation0 [shape = 'u32[]', space=smem, size = 0x4, offset = 0x4, fixed_abs, tag = 'smem constant byte address 0x4 - core index']
  #allocation1 [shape = 'u32[144,128]{1,0:T(1,128)}', space=vmem, size = 0x12000, scoped, tag = 'internal scratch']
  %s0 = inlined_call_operand.vmem [shape: f32[16,32], index: 0, kind: input, shape index: {}]
  %s1 = inlined_call_operand.vmem [shape: f32[256,32], index: 1, kind: input, shape index: {}]
  %s2 = inlined_call_operand.vmem [shape: s32[16,1], index: 2, kind: input, shape index: {}]
  %s3 = inlined_call_operand.hbm [shape: f32[16,256], index: 3, kind: output, shape index: {}]
  %s4 = sld [smem:[#allocation0]]
  $region45: #{tpu_custom_call.1} parent=0
    _
  %s6 = ssub.s32 1, %s4
  %s7 = scalar_select 0, %s6, %s4
  $region1: #{tpu_custom_call.1} parent=0
    #allocation2 [shape = 'u8[8192]{0}', space=vmem, size = 0x2000, scoped, tag = 'output window, operand 0']
    #allocation3 [shape = 's32[2]{0}', space=sflag, size = 0x8, scoped, tag = 'scoped memory for tpu_custom_call.1']
    %8 = vsyncpa [#allocation3], 0
    %s9 = scalar_lea.sflag [#allocation3], 1
    %10 = vsyncpa %s9, 0
    loop: start=0, step=1, limit=6
    $region2: #{tpu_custom_call.1} parent=1 // loop_pre_header
      _
    $region3: #{tpu_custom_call.1} parent=1 // loop_header
      %s12 = sphi 0, %s16
      %p13 = scmp.ge.s32.totalorder %s12, 6
      %s19 = sphi 0, %s31
      %s20 = sphi 0, %s27
      %s21 = sphi 0, %s19
      %s22 = sphi 0, %s20
      %s23 = sphi 0, %s21
      %s24 = sphi 0, %s22
      %s34 = sphi 0, %s36
      %s37 = sphi 0, %s34
      %s38 = sphi 0, %s37
      %s54 = sphi 0, %s38
      %s60 = sphi 0, %s62
      %s63 = sphi 0, %s60
      %s64 = sphi 0, %s63
      %s80 = sphi 0, %s64
      %s86 = sphi 0, %s88
      %s89 = sphi 0, %s86
      %s90 = sphi 0, %s89
      %s106 = sphi 0, %s90
      %s114 = sphi 0, %s116
      %s117 = sphi 0, %s114
      %s118 = sphi 0, %s117
      %s134 = sphi 0, %s118
    $region4: #{tpu_custom_call.1} parent=1 // loop_header_branch
      %15 = sbr.rel (%p13) target = $region8
    $region5: #{tpu_custom_call.1} parent=1 // loop_body
      %s17 = ssub.s32 %s12, 1
      %s18 = ssub.s32 %s12, 2
      %s25 = sadd.s32 1, %s20
      %p26 = scmp.ge.s32.totalorder %s25, 2
      %s27 = scalar_select %p26, 0, %s25
      %s28 = sadd.s32 1, %s19
      %s29 = scalar_select %p26, %s28, %s19
      %p30 = scmp.ge.s32.totalorder %s29, 2
      %s31 = scalar_select %p30, 0, %s29
      %s32 = ssub.s32 %s19, %s31
      %p33 = scmp.eq.s32.totalorder %s32, 0
      %s35 = sadd.s32 %s34, 1
      %s36 = scalar_select %p33, %s34, %s35
      %p39 = pneg %p33
      %p40 = scmp.eq.s32.totalorder %s12, 3
      %p41 = por %p39, %p40
      %p42 = scmp.ne.s32.totalorder %s34, %s37
      %p43 = scmp.eq.s32.totalorder %s12, 0
      %p44 = por %p42, %p43
      %p45 = scmp.ne.s32.totalorder %s34, %s37
      %p46 = scmp.eq.s32.totalorder %s17, 3
      %p47 = por %p45, %p46
      %p48 = scmp.ne.s32.totalorder %s37, %s38
      %p49 = scmp.eq.s32.totalorder %s17, 0
      %p50 = por %p48, %p49
      %p51 = scmp.ne.s32.totalorder %s37, %s38
      %p52 = scmp.eq.s32.totalorder %s18, 3
      %p53 = por %p51, %p52
      %p55 = scmp.ne.s32.totalorder %s38, %s54
      %p56 = scmp.eq.s32.totalorder %s18, 0
      %p57 = por %p55, %p56
      %s58 = ssub.s32 %s20, %s27
      %p59 = scmp.eq.s32.totalorder %s58, 0
      %s61 = sadd.s32 %s60, 1
      %s62 = scalar_select %p59, %s60, %s61
      %p65 = pneg %p59
      %p66 = scmp.eq.s32.totalorder %s12, 3
      %p67 = por %p65, %p66
      %p68 = scmp.ne.s32.totalorder %s60, %s63
      %p69 = scmp.eq.s32.totalorder %s12, 0
      %p70 = por %p68, %p69
      %p71 = scmp.ne.s32.totalorder %s60, %s63
      %p72 = scmp.eq.s32.totalorder %s17, 3
      %p73 = por %p71, %p72
      %p74 = scmp.ne.s32.totalorder %s63, %s64
      %p75 = scmp.eq.s32.totalorder %s17, 0
      %p76 = por %p74, %p75
      %p77 = scmp.ne.s32.totalorder %s63, %s64
      %p78 = scmp.eq.s32.totalorder %s18, 3
      %p79 = por %p77, %p78
      %p81 = scmp.ne.s32.totalorder %s64, %s80
      %p82 = scmp.eq.s32.totalorder %s18, 0
      %p83 = por %p81, %p82
      %s84 = ssub.s32 %s19, %s31
      %p85 = scmp.eq.s32.totalorder %s84, 0
      %s87 = sadd.s32 %s86, 1
      %s88 = scalar_select %p85, %s86, %s87
      %p91 = pneg %p85
      %p92 = scmp.eq.s32.totalorder %s12, 3
      %p93 = por %p91, %p92
      %p94 = scmp.ne.s32.totalorder %s86, %s89
      %p95 = scmp.eq.s32.totalorder %s12, 0
      %p96 = por %p94, %p95
      %p97 = scmp.ne.s32.totalorder %s86, %s89
      %p98 = scmp.eq.s32.totalorder %s17, 3
      %p99 = por %p97, %p98
      %p100 = scmp.ne.s32.totalorder %s89, %s90
      %p101 = scmp.eq.s32.totalorder %s17, 0
      %p102 = por %p100, %p101
      %p103 = scmp.ne.s32.totalorder %s89, %s90
      %p104 = scmp.eq.s32.totalorder %s18, 3
      %p105 = por %p103, %p104
      %p107 = scmp.ne.s32.totalorder %s90, %s106
      %p108 = scmp.eq.s32.totalorder %s18, 0
      %p109 = por %p107, %p108
      %s110 = ssub.s32 %s19, %s31
      %s111 = ssub.s32 %s20, %s27
      %s112 = sor.u32 %s110, %s111
      %p113 = scmp.eq.s32.totalorder %s112, 0
      %s115 = sadd.s32 %s114, 1
      %s116 = scalar_select %p113, %s114, %s115
      %p119 = pneg %p113
      %p120 = scmp.eq.s32.totalorder %s12, 3
      %p121 = por %p119, %p120
      %p122 = scmp.ne.s32.totalorder %s114, %s117
      %p123 = scmp.eq.s32.totalorder %s12, 0
      %p124 = por %p122, %p123
      %p125 = scmp.ne.s32.totalorder %s114, %s117
      %p126 = scmp.eq.s32.totalorder %s17, 3
      %p127 = por %p125, %p126
      %p128 = scmp.ne.s32.totalorder %s117, %s118
      %p129 = scmp.eq.s32.totalorder %s17, 0
      %p130 = por %p128, %p129
      %p131 = scmp.ne.s32.totalorder %s117, %s118
      %p132 = scmp.eq.s32.totalorder %s18, 3
      %p133 = por %p131, %p132
      %p135 = scmp.ne.s32.totalorder %s118, %s134
      %p136 = scmp.eq.s32.totalorder %s18, 0
      %p137 = por %p135, %p136
      %p138 = scmp.le.s32.totalorder 1, %s12
      %p139 = scmp.lt.s32.totalorder %s12, 5
      %p140 = pnand %p138, %p139
      %p141 = pneg %p140
      // Predicated region
      $region9: #{tpu_custom_call.1} parent=5 // pred_check
        _
      $region10: #{tpu_custom_call.1} parent=5 // pred_check_branch
        %143 = sbr.rel (%p140) target = $region12
      $region11: #{tpu_custom_call.1} parent=5 // pred_region
        %s144 = ssub.s32 %s12, 1
      $region12: #{tpu_custom_call.1} parent=5 // pred_fallthru
        _
      %p145 = scmp.lt.s32.totalorder %s12, 4
      // Predicated region
      $region13: #{tpu_custom_call.1} parent=5 // pred_check
        %p146 = pneg %p145
      $region14: #{tpu_custom_call.1} parent=5 // pred_check_branch
        %148 = sbr.rel (%p146) target = $region16
      $region15: #{tpu_custom_call.1} parent=5 // pred_region
        // Predicated region
        $region17: #{tpu_custom_call.1} parent=15 // pred_check
          %p149 = pneg %p44
        $region18: #{tpu_custom_call.1} parent=15 // pred_check_branch
          %151 = sbr.rel (%p149) target = $region20
        $region19: #{tpu_custom_call.1} parent=15 // pred_region
          %p152 = scmp.lt.s32.totalorder %s19, 1
          %s153 = scalar_select %p152, %s19, 1
          %s154 = smul.addr %s153, 8
          %s155 = scalar_lea.vmem %s0, %s154
        $region20: #{tpu_custom_call.1} parent=15 // pred_fallthru
          _
        // Predicated region
        $region21: #{tpu_custom_call.1} parent=15 // pred_check
          %p156 = pneg %p70
        $region22: #{tpu_custom_call.1} parent=15 // pred_check_branch
          %158 = sbr.rel (%p156) target = $region24
        $region23: #{tpu_custom_call.1} parent=15 // pred_region
          %s159 = smul.u32 16, %s20
          %p160 = scmp.lt.s32.totalorder %s159, 31
          %s161 = scalar_select %p160, %s159, 31
          %s162 = smul.addr %s161, 8
          %s163 = scalar_lea.vmem %s1, %s162
          %s164 = smul.u32 16, %s20
        $region24: #{tpu_custom_call.1} parent=15 // pred_fallthru
          _
        // Predicated region
        $region25: #{tpu_custom_call.1} parent=15 // pred_check
          %p165 = pneg %p96
        $region26: #{tpu_custom_call.1} parent=15 // pred_check_branch
          %167 = sbr.rel (%p165) target = $region28
        $region27: #{tpu_custom_call.1} parent=15 // pred_region
          %p168 = scmp.lt.s32.totalorder %s19, 1
          %s169 = scalar_select %p168, %s19, 1
          %s170 = smul.addr %s169, 8
          %s171 = scalar_lea.vmem %s2, %s170
        $region28: #{tpu_custom_call.1} parent=15 // pred_fallthru
          _
      $region16: #{tpu_custom_call.1} parent=5 // pred_fallthru
        _
      %p172 = scmp.le.s32.totalorder 1, %s12
      %p173 = scmp.lt.s32.totalorder %s12, 5
      %p174 = pnand %p172, %p173
      %p175 = pneg %p174
      // Predicated region
      $region29: #{tpu_custom_call.1} parent=5 // pred_check
        _
      $region30: #{tpu_custom_call.1} parent=5 // pred_check_branch
        %177 = sbr.rel (%p174) target = $region32
      $region31: #{tpu_custom_call.1} parent=5 // pred_region
        %s178 = ssub.s32 %s12, 1
        %p179 = scmp.lt.s32.totalorder %s21, 1
        %s180 = scalar_select %p179, %s21, 1
        %s181 = smul.addr %s180, 8
        %s182 = scalar_lea.vmem %s0, %s181
        %p183 = pneg %p50
        %p184 = pneg %p47
        %s185 = smul.u32 16, %s22
        %p186 = scmp.lt.s32.totalorder %s185, 31
        %s187 = scalar_select %p186, %s185, 31
        %s188 = smul.addr %s187, 8
        %s189 = scalar_lea.vmem %s1, %s188
        %p190 = pneg %p76
        %p191 = pneg %p73
        %p192 = scmp.lt.s32.totalorder %s21, 1
        %s193 = scalar_select %p192, %s21, 1
        %s194 = smul.addr %s193, 8
        %s195 = scalar_lea.vmem %s2, %s194
        %p196 = pneg %p102
        %p197 = pneg %p99
        %p198 = pneg %p130
        %p199 = pneg %p127
        %s200 = sand.u32 %s117, 1
        %s201 = scalar_lea.sflag [#allocation3], %s200
        %s202 = sand.u32 %s117, 1
        %s203 = smul.addr %s202, 8
        %s204 = scalar_lea.vmem [#allocation2], %s203
        %p205 = scmp.lt.s32.totalorder %s21, 1
        %s206 = scalar_select %p205, %s21, 1
        %s207 = smul.addr %s206, 8
        %s208 = scalar_lea.vmem %s0, %s207
        %s209 = smul.u32 16, %s22
        %p210 = scmp.lt.s32.totalorder %s209, 31
        %s211 = scalar_select %p210, %s209, 31
        %s212 = smul.addr %s211, 8
        %s213 = scalar_lea.vmem %s1, %s212
        %s214 = smul.u32 16, %s22
        %p215 = scmp.lt.s32.totalorder %s21, 1
        %s216 = scalar_select %p215, %s21, 1
        %s217 = smul.addr %s216, 8
        %s218 = scalar_lea.vmem %s2, %s217
        %v219 = vld [vmem:[%s208] sm:$0xff]
        %v220 = vld [vmem:[%s213] sm:$0xff]
        %v221 = vld [vmem:[%s213 + $0x8] sm:$0xff]
        %v222 = vld [vmem:[%s213 + $0x10] sm:$0xff]
        %v223 = vld [vmem:[%s213 + $0x18] sm:$0xff]
        %v224 = vld [vmem:[%s213 + $0x20] sm:$0xff]
        %v225 = vld [vmem:[%s213 + $0x28] sm:$0xff]
        %v226 = vld [vmem:[%s213 + $0x30] sm:$0xff]
        %v227 = vld [vmem:[%s213 + $0x38] sm:$0xff]
        %v228 = vld [vmem:[%s213 + $0x40] sm:$0xff]
        %v229 = vld [vmem:[%s213 + $0x48] sm:$0xff]
        %v230 = vld [vmem:[%s213 + $0x50] sm:$0xff]
        %v231 = vld [vmem:[%s213 + $0x58] sm:$0xff]
        %v232 = vld [vmem:[%s213 + $0x60] sm:$0xff]
        %v233 = vld [vmem:[%s213 + $0x68] sm:$0xff]
        %v234 = vld [vmem:[%s213 + $0x70] sm:$0xff]
        %v235 = vld [vmem:[%s213 + $0x78] sm:$0xff]
        %vm236 = vcmask 261120
        %v238 = vsel %vm236, %v219, 0
        %v241 = vsel %vm236, %v220, 0
        %v244 = vsel %vm236, %v221, 0
        %v247 = vsel %vm236, %v222, 0
        %v250 = vsel %vm236, %v223, 0
        %v253 = vsel %vm236, %v224, 0
        %v256 = vsel %vm236, %v225, 0
        %v259 = vsel %vm236, %v226, 0
        %v262 = vsel %vm236, %v227, 0
        %v265 = vsel %vm236, %v228, 0
        %v268 = vsel %vm236, %v229, 0
        %v271 = vsel %vm236, %v230, 0
        %v274 = vsel %vm236, %v231, 0
        %v277 = vsel %vm236, %v232, 0
        %v280 = vsel %vm236, %v233, 0
        %v283 = vsel %vm236, %v234, 0
        %v286 = vsel %vm236, %v235, 0
        %288 = vmatprep.subr.mxu0 0.0
        %289 = vmatpush1.xpose.msra.mxu0 %v241
        %290 = vmatprep.subr.mxu0 0.0
        %291 = vmatpush1.xpose.msra.mxu0 %v244
        %292 = vmatprep.subr.mxu0 0.0
        %293 = vmatpush1.xpose.msra.mxu0 %v247
        %294 = vmatprep.subr.mxu0 0.0
        %295 = vmatpush1.xpose.msra.mxu0 %v250
        %296 = vmatprep.subr.mxu0 0.0
        %297 = vmatpush1.xpose.msra.mxu0 %v253
        %298 = vmatprep.subr.mxu0 0.0
        %299 = vmatpush1.xpose.msra.mxu0 %v256
        %300 = vmatprep.subr.mxu0 0.0
        %301 = vmatpush1.xpose.msra.mxu0 %v259
        %302 = vmatprep.subr.mxu0 0.0
        %303 = vmatpush1.xpose.msra.mxu0 %v262
        %304 = vmatprep.subr.mxu0 0.0
        %305 = vmatpush1.xpose.msra.mxu0 %v265
        %306 = vmatprep.subr.mxu0 0.0
        %307 = vmatpush1.xpose.msra.mxu0 %v268
        %308 = vmatprep.subr.mxu0 0.0
        %309 = vmatpush1.xpose.msra.mxu0 %v271
        %310 = vmatprep.subr.mxu0 0.0
        %311 = vmatpush1.xpose.msra.mxu0 %v274
        %312 = vmatprep.subr.mxu0 0.0
        %313 = vmatpush1.xpose.msra.mxu0 %v277
        %314 = vmatprep.subr.mxu0 0.0
        %315 = vmatpush1.xpose.msra.mxu0 %v280
        %316 = vmatprep.subr.mxu0 0.0
        %317 = vmatpush1.xpose.msra.mxu0 %v283
        %318 = vmatprep.subr.mxu0 0.0
        %319 = vmatpush1.xpose.msra.mxu0 %v286
        %320 = vmatprep.subr.mxu0 0.0
        %321 = vmatpush1.xpose.msra.mxu0 0.0
        %322 = vmatprep.subr.mxu0 0.0
        %323 = vmatpush1.xpose.msra.mxu0 0.0
        %324 = vmatprep.subr.mxu0 0.0
        %325 = vmatpush1.xpose.msra.mxu0 0.0
        %326 = vmatprep.subr.mxu0 0.0
        %327 = vmatpush1.xpose.msra.mxu0 0.0
        %328 = vmatprep.subr.mxu0 0.0
        %329 = vmatpush1.xpose.msra.mxu0 0.0
        %330 = vmatprep.subr.mxu0 0.0
        %331 = vmatpush1.xpose.msra.mxu0 0.0
        %332 = vmatprep.subr.mxu0 0.0
        %333 = vmatpush1.xpose.msra.mxu0 0.0
        %334 = vmatprep.subr.mxu0 0.0
        %335 = vmatpush1.xpose.msra.mxu0 0.0
        %336 = vmatprep.subr.mxu0 0.0
        %337 = vmatpush1.xpose.msra.mxu0 0.0
        %338 = vmatprep.subr.mxu0 0.0
        %339 = vmatpush1.xpose.msra.mxu0 0.0
        %340 = vmatprep.subr.mxu0 0.0
        %341 = vmatpush1.xpose.msra.mxu0 0.0
        %342 = vmatprep.subr.mxu0 0.0
        %343 = vmatpush1.xpose.msra.mxu0 0.0
        %344 = vmatprep.subr.mxu0 0.0
        %345 = vmatpush1.xpose.msra.mxu0 0.0
        %346 = vmatprep.subr.mxu0 0.0
        %347 = vmatpush1.xpose.msra.mxu0 0.0
        %348 = vmatprep.subr.mxu0 0.0
        %349 = vmatpush1.xpose.msra.mxu0 0.0
        %350 = vmatprep.subr.mxu0 0.0
        %351 = vmatpush1.xpose.msra.mxu0 0.0
        %352 = vmatprep.mubr.f32.mxu0 0.0
        %353 = vmatmul.mubr.f32.gmra.mrb[0].mxu0 %v238
        %v354 = vpop.f32.mrb[0].mxu0
        %v355 = vadd.f32 0.0, %v354
        %v356 = vpop.f32.mrb[0].mxu0
        %357 = vdwg.mxu0
        %v358 = vld [vmem:[%s218] sm:$0xff]
        %s359 = smul.u32 %s22, 128
        %v360 = vstv %s359
        %v361 = vsub.s32 %v358, %v360
        %v362 = vlaneseq
        %v363 = vand.u32 %v362, 127
        %v364 = vmul.f32 %v355, 30.0
        %365 = vset.pattern.permute.xlu0 0
        %366 = vperm.xlu0 %365, %v361
        %v367 = vpop.permute.xlu0 %366
        %vm368 = vcmp.eq.s32.totalorder %v363, %v367
        %v369 = vsub.f32 %v364, 12.0
        %v370 = vsel %vm368, %v369, %v364
        %371 = vst [vmem:[%s204] sm:$0xff] %v370
        %s372 = sand.u32 %s117, 1
        %s373 = scalar_lea.sflag [#allocation3], %s372
        %s374 = sand.u32 %s117, 1
        %s375 = smul.addr %s374, 8
        %s376 = scalar_lea.vmem [#allocation2], %s375
        // Predicated region
        $region33: #{tpu_custom_call.1} parent=31 // pred_check
          %p377 = pneg %p127
        $region34: #{tpu_custom_call.1} parent=31 // pred_check_branch
          %379 = sbr.rel (%p377) target = $region36
        $region35: #{tpu_custom_call.1} parent=31 // pred_region
          %s381 = ssub.s32 128, 128
          %382 = vsyncadd %s373, %s381
          %s383 = smul.addr %s21, 2
          %s384 = sadd.s32 %s22, %s383
          %s385 = smul.addr %s384, 128
          %s386 = scalar_lea.hbm %s3, %s385
          %s388 = sshll.u32 %s376, 4
          %s389 = int_to_ptr.vmem [resolvable:$true] %s388
          %391 = dma.vmem_to_hbm [thread:$0]  %s389, 128, %s386, %s373
        $region36: #{tpu_custom_call.1} parent=31 // pred_fallthru
          _
      $region32: #{tpu_custom_call.1} parent=5 // pred_fallthru
        _
      %p392 = scmp.le.s32.totalorder 2, %s12
      // Predicated region
      $region37: #{tpu_custom_call.1} parent=5 // pred_check
        %p393 = pneg %p392
      $region38: #{tpu_custom_call.1} parent=5 // pred_check_branch
        %395 = sbr.rel (%p393) target = $region40
      $region39: #{tpu_custom_call.1} parent=5 // pred_region
        %s396 = ssub.s32 %s12, 2
        // Predicated region
        $region41: #{tpu_custom_call.1} parent=39 // pred_check
          %p397 = pneg %p133
        $region42: #{tpu_custom_call.1} parent=39 // pred_check_branch
          %399 = sbr.rel (%p397) target = $region44
        $region43: #{tpu_custom_call.1} parent=39 // pred_region
          %s400 = sand.u32 %s118, 1
          %s401 = scalar_lea.sflag [#allocation3], %s400
          %s402 = sand.u32 %s118, 1
          %s403 = smul.addr %s402, 8
          %s404 = scalar_lea.vmem [#allocation2], %s403
          %405 = dma.done %s401, 128
        $region44: #{tpu_custom_call.1} parent=39 // pred_fallthru
          _
      $region40: #{tpu_custom_call.1} parent=5 // pred_fallthru
        _
    $region6: #{tpu_custom_call.1} parent=1 // loop_footer
      %s16 = sadd.s32 1, %s12
    $region7: #{tpu_custom_call.1} parent=1 // loop_footer_branch
      %11 = sbr.rel target = $region3
    $region8: #{tpu_custom_call.1} parent=1 // loop_exit
      _
    %406 = vsyncpa [#allocation3], 1
    %s407 = scalar_lea.sflag [#allocation3], 1
    %408 = vsyncpa %s407, 1

</llo_original>
